<compile_context>
chip_gen: v6e
topology: v6e:2x2x1
jax: 0.10.0
libtpu: 0.0.40
codegen_flags: <defaults>
</compile_context>

<pallas_src>
from functools import partial

import jax
import jax.numpy as jnp
import numpy as np
from jax.experimental import pallas as pl
from jax.experimental.pallas import tpu as pltpu

LANE = 128
_UNROLL_MAX_C = 64


def _round_up(x, m):
    return ((x + m - 1) // m) * m


# --------------------------------------------------------------------------
# Kernel: one batch-row tile (batch on lanes, classes on the leading axis)
# --------------------------------------------------------------------------
def _focal_kernel(logits_ref, targets_ref, alpha_ref, out_ref, *,
                  gamma, reduction, unroll):
    """
    logits_ref : (C, tr, 128)  input dtype   -- class-major, batch on lanes
    targets_ref: (tr, 128)     int32         -- padded samples hold -1
    alpha_ref  : unroll -> (C,) f32 in SMEM ; else (tr, 128) f32 per-sample
    out_ref    : 'none' -> (tr, 128) f32 ; else (1, 128) per-lane partial sums
    """
    C = logits_ref.shape[0]
    t = targets_ref[...]                                        # (tr, 128) i32

    if unroll:
        # ---- static unrolled class loop: pure VPU/EUP elementwise work ----
        x0 = logits_ref[0].astype(jnp.float32)
        m = x0
        for c in range(1, C):
            m = jnp.maximum(m, logits_ref[c].astype(jnp.float32))
        s = jnp.exp(x0 - m)
        x_t = jnp.where(t == 0, x0, 0.0)
        a_t = jnp.where(t == 0, alpha_ref[0], 0.0)              # SMEM scalar
        for c in range(1, C):
            xc = logits_ref[c].astype(jnp.float32)
            s = s + jnp.exp(xc - m)
            is_c = t == c
            x_t = jnp.where(is_c, xc, x_t)
            a_t = jnp.where(is_c, alpha_ref[c], a_t)
        # padded samples (t == -1) match no class -> a_t == 0 masks them
    else:
        # ---- vectorized fallback for larger C ----
        x = logits_ref[...].astype(jnp.float32)                 # (C, tr, 128)
        m = jnp.max(x, axis=0)
        s = jnp.sum(jnp.exp(x - m[None]), axis=0)
        cls = jax.lax.broadcasted_iota(jnp.int32, x.shape, 0)
        x_t = jnp.sum(jnp.where(cls == t[None], x, 0.0), axis=0)
        a_t = alpha_ref[...]          # per-sample alpha (0 on padded rows)

    ce = m + jnp.log(s) - x_t                                   # (tr, 128) >= 0
    pt = jnp.exp(-ce)
    base = 1.0 - pt

    # focal modulation (1 - pt)**gamma with gamma static
    g = float(gamma)
    if g.is_integer() and 0 <= int(g) <= 8:
        gi = int(g)
        if gi == 0:
            mod = jnp.ones_like(base)
        else:
            mod = base
            for _ in range(gi - 1):
                mod = mod * base
    else:
        safe = jnp.maximum(base, 1e-30)
        mod = jnp.where(base > 0.0, jnp.exp(g * jnp.log(safe)), 0.0)

    loss = a_t * mod * ce                                       # (tr, 128)

    if reduction == "none":
        out_ref[...] = loss
    else:
        out_ref[...] = jnp.sum(loss, axis=0, keepdims=True)     # (1, 128)


# --------------------------------------------------------------------------
# Wrapper
# --------------------------------------------------------------------------
def focal_loss(logits, targets, alpha=None, gamma=2.0, reduction="mean",
               block_rows=None, target_block_bytes=2 * 1024 * 1024):
    """logits: (B, C) float; targets: (B,) int; alpha: (C,) float or None."""
    if reduction not in ("mean", "sum", "none"):
        raise ValueError(f"unsupported reduction: {reduction}")
    B, C = logits.shape
    if logits.dtype not in (jnp.float32, jnp.bfloat16, jnp.float16):
        logits = logits.astype(jnp.float32)
    targets = targets.astype(jnp.int32)
    esize = jnp.dtype(logits.dtype).itemsize
    unroll = C <= _UNROLL_MAX_C

    # --- batch-on-lanes layout: sample n -> (row n // 128, lane n % 128) ---
    rows = _round_up(B, LANE) // LANE
    # C-aware row tile: keep the logits block around target_block_bytes
    # (>= ~512 KiB for HBM roofline; double-buffered footprint fits all gens).
    if block_rows is None:
        tr = (target_block_bytes // (C * LANE * esize)) // 8 * 8
    else:
        tr = block_rows // 8 * 8
    tr = max(8, tr)
    if tr >= rows:
        tr = rows                      # whole batch in one grid step
    rows_pad = _round_up(rows, tr)
    b_pad = rows_pad * LANE
    # TODO(synk): for very large C (C*8*128*esize beyond the VMEM budget) the
    # class dim would also need tiling with a running log-sum-exp.

    pad = b_pad - B
    if pad:
        logits = jnp.pad(logits, ((0, pad), (0, 0)))
        targets = jnp.pad(targets, ((0, pad),), constant_values=-1)
    logits3 = logits.T.reshape(C, rows_pad, LANE)   # class-major, lane-dense
    targets2 = targets.reshape(rows_pad, LANE)

    if unroll:
        # alpha stays in SMEM; the per-class selects gather it in-kernel
        alpha_arg = (jnp.ones((C,), jnp.float32) if alpha is None
                     else jnp.asarray(alpha, jnp.float32))
        alpha_spec = pl.BlockSpec(memory_space=pltpu.MemorySpace.SMEM)
    else:
        # large C: per-sample alpha gathered in the wrapper (O(B) bytes);
        # zeros on the padded rows double as the padding mask
        a_t = (jnp.ones((B,), jnp.float32) if alpha is None
               else jnp.asarray(alpha, jnp.float32)[targets[:B]])
        alpha_arg = jnp.pad(a_t, ((0, pad),)).reshape(rows_pad, LANE)
        alpha_spec = pl.BlockSpec((tr, LANE), lambda i: (i, 0))

    num_tiles = rows_pad // tr
    kernel = partial(_focal_kernel, gamma=float(gamma), reduction=reduction,
                     unroll=unroll)
    in_specs = [
        pl.BlockSpec((C, tr, LANE), lambda i: (0, i, 0)),   # logits tile
        pl.BlockSpec((tr, LANE), lambda i: (i, 0)),         # targets tile
        alpha_spec,                                          # alpha
    ]
    cost = pl.CostEstimate(
        flops=int(b_pad * (6 * C + 12)),
        transcendentals=int(b_pad * (C + 3)),
        bytes_accessed=int(b_pad * (C * esize + 12)))
    cparams = pltpu.CompilerParams(dimension_semantics=("parallel",))

    if reduction == "none":
        out = pl.pallas_call(
            kernel,
            out_shape=jax.ShapeDtypeStruct((rows_pad, LANE), jnp.float32),
            grid=(num_tiles,),
            in_specs=in_specs,
            out_specs=pl.BlockSpec((tr, LANE), lambda i: (i, 0)),
            compiler_params=cparams,
            cost_estimate=cost,
        )(logits3, targets2, alpha_arg)
        return out.reshape(-1)[:B]

    # sum / mean: lane-dense per-tile partial sums, finished in the wrapper
    partials = pl.pallas_call(
        kernel,
        out_shape=jax.ShapeDtypeStruct((num_tiles, LANE), jnp.float32),
        grid=(num_tiles,),
        in_specs=in_specs,
        out_specs=pl.BlockSpec((1, LANE), lambda i: (i, 0)),
        compiler_params=cparams,
        cost_estimate=cost,
    )(logits3, targets2, alpha_arg)
    total = jnp.sum(partials)
    return total / B if reduction == "mean" else total


# --------------------------------------------------------------------------
# Pure-JAX reference (mirrors the PyTorch FocalLoss semantics)
# --------------------------------------------------------------------------
def reference_focal_loss(logits, targets, alpha=None, gamma=2.0,
                         reduction="mean"):
    logp = jax.nn.log_softmax(logits.astype(jnp.float32), axis=-1)
    ce = -jnp.take_along_axis(logp, targets[:, None].astype(jnp.int32),
                              axis=-1)[:, 0]
    pt = jnp.exp(-ce)
    loss = (1.0 - pt) ** gamma * ce
    if alpha is not None:
        loss = jnp.asarray(alpha, jnp.float32)[targets] * loss
    if reduction == "mean":
        return loss.mean()
    if reduction == "sum":
        return loss.sum()
    return loss


if __name__ == "__main__":
    key = jax.random.PRNGKey(0)
    k1, k2, k3 = jax.random.split(key, 3)

    def check(out, ref, rtol=1e-5, atol=1e-6):
        np.testing.assert_allclose(np.asarray(jax.block_until_ready(out)),
                                   np.asarray(jax.block_until_ready(ref)),
                                   rtol=rtol, atol=atol)

    # ECG-like small shapes: 8 samples, 5 classes.
    B, C = 8, 5
    logits = jax.random.normal(k1, (B, C), jnp.float32) * 2.0
    targets = jax.random.randint(k2, (B,), 0, C, jnp.int32)
    alpha = jax.random.uniform(k3, (C,), jnp.float32, minval=0.25, maxval=1.0)

    for reduction in ("mean", "sum", "none"):
        for a in (alpha, None):
            check(focal_loss(logits, targets, alpha=a, gamma=2.0,
                             reduction=reduction),
                  reference_focal_loss(logits, targets, alpha=a, gamma=2.0,
                                       reduction=reduction))

    # non-integer gamma -> general modulation path
    check(focal_loss(logits, targets, alpha=alpha, gamma=1.5, reduction="mean"),
          reference_focal_loss(logits, targets, alpha=alpha, gamma=1.5,
                               reduction="mean"))

    # multi-tile grid + batch padding + lane-dense partial sums
    B2 = 3000
    logits2 = jax.random.normal(k1, (B2, C), jnp.float32)
    targets2 = jax.random.randint(k2, (B2,), 0, C, jnp.int32)
    check(focal_loss(logits2, targets2, alpha=alpha, gamma=2.0,
                     reduction="mean", block_rows=8),
          reference_focal_loss(logits2, targets2, alpha=alpha, gamma=2.0,
                               reduction="mean"), rtol=1e-4)
    check(focal_loss(logits2, targets2, alpha=None, gamma=2.0,
                     reduction="none", block_rows=8),
          reference_focal_loss(logits2, targets2, alpha=None, gamma=2.0,
                               reduction="none"), atol=2e-6)

    # large-C fallback (vectorized class path)
    C3, B3 = 80, 64
    logits_l = jax.random.normal(k1, (B3, C3), jnp.float32)
    targets_l = jax.random.randint(k2, (B3,), 0, C3, jnp.int32)
    check(focal_loss(logits_l, targets_l, alpha=None, gamma=2.0,
                     reduction="sum"),
          reference_focal_loss(logits_l, targets_l, alpha=None, gamma=2.0,
                               reduction="sum"), rtol=1e-4, atol=1e-5)

    print("KERNEL_OK")
</pallas_src>

<mosaic_0001>
module attributes {stable_mosaic.version = 11 : i64} {
  func.func @_focal_kernel(%arg0: i32, %arg1: memref<5x1x128xf32, #tpu.memory_space<vmem>>, %arg2: memref<1x128xi32, #tpu.memory_space<vmem>>, %arg3: memref<5xf32, #tpu.memory_space<smem>>, %arg4: memref<1x128xf32, #tpu.memory_space<vmem>>) attributes {dimension_semantics = [#tpu.dimension_semantics<parallel>], iteration_bounds = array<i64: 1>, scalar_prefetch = 0 : i64, scratch_operands = 0 : i64, tpu.core_type = #tpu.core_type<tc>, window_params = [{transform_indices = @transform_0, window_bounds = array<i64: 5, 1, 128>}, {transform_indices = @transform_1, window_bounds = array<i64: 1, 128>}, {transform_indices = @transform_2, window_bounds = array<i64: 5>}, {transform_indices = @transform_3, window_bounds = array<i64: 1, 128>}]} {
    %c0 = arith.constant 0 : index
    %c0_0 = arith.constant 0 : index
    %0 = vector.load %arg2[%c0, %c0_0] : memref<1x128xi32, #tpu.memory_space<vmem>>, vector<1x128xi32>
    %c0_1 = arith.constant 0 : index
    %c0_2 = arith.constant 0 : index
    %c0_3 = arith.constant 0 : index
    %1 = vector.load %arg1[%c0_1, %c0_2, %c0_3] : memref<5x1x128xf32, #tpu.memory_space<vmem>>, vector<1x1x128xf32>
    %2 = vector.shape_cast %1 : vector<1x1x128xf32> to vector<1x128xf32>
    %c1 = arith.constant 1 : index
    %c0_4 = arith.constant 0 : index
    %c0_5 = arith.constant 0 : index
    %3 = vector.load %arg1[%c1, %c0_4, %c0_5] : memref<5x1x128xf32, #tpu.memory_space<vmem>>, vector<1x1x128xf32>
    %4 = vector.shape_cast %3 : vector<1x1x128xf32> to vector<1x128xf32>
    %5 = arith.maximumf %2, %4 : vector<1x128xf32>
    %c2 = arith.constant 2 : index
    %c0_6 = arith.constant 0 : index
    %c0_7 = arith.constant 0 : index
    %6 = vector.load %arg1[%c2, %c0_6, %c0_7] : memref<5x1x128xf32, #tpu.memory_space<vmem>>, vector<1x1x128xf32>
    %7 = vector.shape_cast %6 : vector<1x1x128xf32> to vector<1x128xf32>
    %8 = arith.maximumf %5, %7 : vector<1x128xf32>
    %c3 = arith.constant 3 : index
    %c0_8 = arith.constant 0 : index
    %c0_9 = arith.constant 0 : index
    %9 = vector.load %arg1[%c3, %c0_8, %c0_9] : memref<5x1x128xf32, #tpu.memory_space<vmem>>, vector<1x1x128xf32>
    %10 = vector.shape_cast %9 : vector<1x1x128xf32> to vector<1x128xf32>
    %11 = arith.maximumf %8, %10 : vector<1x128xf32>
    %c4 = arith.constant 4 : index
    %c0_10 = arith.constant 0 : index
    %c0_11 = arith.constant 0 : index
    %12 = vector.load %arg1[%c4, %c0_10, %c0_11] : memref<5x1x128xf32, #tpu.memory_space<vmem>>, vector<1x1x128xf32>
    %13 = vector.shape_cast %12 : vector<1x1x128xf32> to vector<1x128xf32>
    %14 = arith.maximumf %11, %13 : vector<1x128xf32>
    %15 = arith.subf %2, %14 : vector<1x128xf32>
    %16 = math.exp %15 : vector<1x128xf32>
    %c0_i32 = arith.constant 0 : i32
    %17 = vector.broadcast %c0_i32 : i32 to vector<1x128xi32>
    %18 = arith.cmpi eq, %0, %17 : vector<1x128xi32>
    %cst = arith.constant 0.000000e+00 : f32
    %19 = vector.broadcast %cst : f32 to vector<1x128xf32>
    %20 = arith.select %18, %2, %19 : vector<1x128xi1>, vector<1x128xf32>
    %c0_i32_12 = arith.constant 0 : i32
    %21 = vector.broadcast %c0_i32_12 : i32 to vector<1x128xi32>
    %22 = arith.cmpi eq, %0, %21 : vector<1x128xi32>
    %c0_13 = arith.constant 0 : index
    %23 = memref.load %arg3[%c0_13] : memref<5xf32, #tpu.memory_space<smem>>
    %cst_14 = arith.constant 0.000000e+00 : f32
    %24 = vector.broadcast %23 : f32 to vector<1x128xf32>
    %25 = vector.broadcast %cst_14 : f32 to vector<1x128xf32>
    %26 = arith.select %22, %24, %25 : vector<1x128xi1>, vector<1x128xf32>
    %c1_15 = arith.constant 1 : index
    %c0_16 = arith.constant 0 : index
    %c0_17 = arith.constant 0 : index
    %27 = vector.load %arg1[%c1_15, %c0_16, %c0_17] : memref<5x1x128xf32, #tpu.memory_space<vmem>>, vector<1x1x128xf32>
    %28 = vector.shape_cast %27 : vector<1x1x128xf32> to vector<1x128xf32>
    %29 = arith.subf %28, %14 : vector<1x128xf32>
    %30 = math.exp %29 : vector<1x128xf32>
    %31 = arith.addf %16, %30 : vector<1x128xf32>
    %c1_i32 = arith.constant 1 : i32
    %32 = vector.broadcast %c1_i32 : i32 to vector<1x128xi32>
    %33 = arith.cmpi eq, %0, %32 : vector<1x128xi32>
    %34 = arith.select %33, %28, %20 : vector<1x128xi1>, vector<1x128xf32>
    %c1_18 = arith.constant 1 : index
    %35 = memref.load %arg3[%c1_18] : memref<5xf32, #tpu.memory_space<smem>>
    %36 = vector.broadcast %35 : f32 to vector<1x128xf32>
    %37 = arith.select %33, %36, %26 : vector<1x128xi1>, vector<1x128xf32>
    %c2_19 = arith.constant 2 : index
    %c0_20 = arith.constant 0 : index
    %c0_21 = arith.constant 0 : index
    %38 = vector.load %arg1[%c2_19, %c0_20, %c0_21] : memref<5x1x128xf32, #tpu.memory_space<vmem>>, vector<1x1x128xf32>
    %39 = vector.shape_cast %38 : vector<1x1x128xf32> to vector<1x128xf32>
    %40 = arith.subf %39, %14 : vector<1x128xf32>
    %41 = math.exp %40 : vector<1x128xf32>
    %42 = arith.addf %31, %41 : vector<1x128xf32>
    %c2_i32 = arith.constant 2 : i32
    %43 = vector.broadcast %c2_i32 : i32 to vector<1x128xi32>
    %44 = arith.cmpi eq, %0, %43 : vector<1x128xi32>
    %45 = arith.select %44, %39, %34 : vector<1x128xi1>, vector<1x128xf32>
    %c2_22 = arith.constant 2 : index
    %46 = memref.load %arg3[%c2_22] : memref<5xf32, #tpu.memory_space<smem>>
    %47 = vector.broadcast %46 : f32 to vector<1x128xf32>
    %48 = arith.select %44, %47, %37 : vector<1x128xi1>, vector<1x128xf32>
    %c3_23 = arith.constant 3 : index
    %c0_24 = arith.constant 0 : index
    %c0_25 = arith.constant 0 : index
    %49 = vector.load %arg1[%c3_23, %c0_24, %c0_25] : memref<5x1x128xf32, #tpu.memory_space<vmem>>, vector<1x1x128xf32>
    %50 = vector.shape_cast %49 : vector<1x1x128xf32> to vector<1x128xf32>
    %51 = arith.subf %50, %14 : vector<1x128xf32>
    %52 = math.exp %51 : vector<1x128xf32>
    %53 = arith.addf %42, %52 : vector<1x128xf32>
    %c3_i32 = arith.constant 3 : i32
    %54 = vector.broadcast %c3_i32 : i32 to vector<1x128xi32>
    %55 = arith.cmpi eq, %0, %54 : vector<1x128xi32>
    %56 = arith.select %55, %50, %45 : vector<1x128xi1>, vector<1x128xf32>
    %c3_26 = arith.constant 3 : index
    %57 = memref.load %arg3[%c3_26] : memref<5xf32, #tpu.memory_space<smem>>
    %58 = vector.broadcast %57 : f32 to vector<1x128xf32>
    %59 = arith.select %55, %58, %48 : vector<1x128xi1>, vector<1x128xf32>
    %c4_27 = arith.constant 4 : index
    %c0_28 = arith.constant 0 : index
    %c0_29 = arith.constant 0 : index
    %60 = vector.load %arg1[%c4_27, %c0_28, %c0_29] : memref<5x1x128xf32, #tpu.memory_space<vmem>>, vector<1x1x128xf32>
    %61 = vector.shape_cast %60 : vector<1x1x128xf32> to vector<1x128xf32>
    %62 = arith.subf %61, %14 : vector<1x128xf32>
    %63 = math.exp %62 : vector<1x128xf32>
    %64 = arith.addf %53, %63 : vector<1x128xf32>
    %c4_i32 = arith.constant 4 : i32
    %65 = vector.broadcast %c4_i32 : i32 to vector<1x128xi32>
    %66 = arith.cmpi eq, %0, %65 : vector<1x128xi32>
    %67 = arith.select %66, %61, %56 : vector<1x128xi1>, vector<1x128xf32>
    %c4_30 = arith.constant 4 : index
    %68 = memref.load %arg3[%c4_30] : memref<5xf32, #tpu.memory_space<smem>>
    %69 = vector.broadcast %68 : f32 to vector<1x128xf32>
    %70 = arith.select %66, %69, %59 : vector<1x128xi1>, vector<1x128xf32>
    %71 = math.log %64 : vector<1x128xf32>
    %72 = arith.addf %14, %71 : vector<1x128xf32>
    %73 = arith.subf %72, %67 : vector<1x128xf32>
    %cst_31 = arith.constant 0.000000e+00 : f32
    %74 = vector.broadcast %cst_31 : f32 to vector<1x128xf32>
    %75 = arith.subf %74, %73 : vector<1x128xf32>
    %76 = math.exp %75 : vector<1x128xf32>
    %cst_32 = arith.constant 1.000000e+00 : f32
    %77 = vector.broadcast %cst_32 : f32 to vector<1x128xf32>
    %78 = arith.subf %77, %76 : vector<1x128xf32>
    %79 = arith.mulf %78, %78 : vector<1x128xf32>
    %80 = arith.mulf %70, %79 : vector<1x128xf32>
    %81 = arith.mulf %80, %73 : vector<1x128xf32>
    %cst_33 = arith.constant dense<0.000000e+00> : vector<128xf32>
    %82 = vector.multi_reduction <add>, %81, %cst_33 [0] : vector<1x128xf32> to vector<128xf32>
    %83 = vector.shape_cast %82 : vector<128xf32> to vector<1x128xf32>
    %c0_34 = arith.constant 0 : index
    %c0_35 = arith.constant 0 : index
    %84 = vector.load %arg4[%c0_34, %c0_35] : memref<1x128xf32, #tpu.memory_space<vmem>>, vector<1x128xf32>
    tpu.vector_store %arg4[%c0_34, %c0_35], %83 {strides = array<i32>} : memref<1x128xf32, #tpu.memory_space<vmem>>, vector<1x128xf32>,
    return
  }
  func.func @transform_0(%arg0: i32) -> (i32, i32, i32) {
    %c0_i32 = arith.constant 0 : i32
    %c0_i32_0 = arith.constant 0 : i32
    %c0_i32_1 = arith.constant 0 : i32
    return %c0_i32, %arg0, %c0_i32_0 : i32, i32, i32
  }
  func.func @transform_1(%arg0: i32) -> (i32, i32) {
    %c0_i32 = arith.constant 0 : i32
    %c0_i32_0 = arith.constant 0 : i32
    return %arg0, %c0_i32 : i32, i32
  }
  func.func @transform_2(%arg0: i32) -> i32 {
    %c0_i32 = arith.constant 0 : i32
    %c0_i32_0 = arith.constant 0 : i32
    return %c0_i32 : i32
  }
  func.func @transform_3(%arg0: i32) -> (i32, i32) {
    %c0_i32 = arith.constant 0 : i32
    %c0_i32_0 = arith.constant 0 : i32
    return %arg0, %c0_i32 : i32, i32
  }
}

</mosaic_0001>

<llo_original>
// kernel: tpu_custom_call.1
$region0: #{tpu_custom_call.1}
  #allocation0 [shape = 'u32[]', space=smem, size = 0x4, offset = 0x4, fixed_abs, tag = 'smem constant byte address 0x4 - core index']
  #allocation1 [shape = 'u32[144,128]{1,0:T(1,128)}', space=vmem, size = 0x12000, scoped, tag = 'internal scratch']
  %s0 = inlined_call_operand.hbm [shape: f32[5,1,128], index: 0, kind: input, shape index: {}]
  %s1 = inlined_call_operand.vmem [shape: s32[1,128], index: 1, kind: input, shape index: {}]
  %s2 = inlined_call_operand.vmem [shape: f32[5], index: 2, kind: input, shape index: {}]
  %s3 = inlined_call_operand.hbm [shape: f32[1,128], index: 3, kind: output, shape index: {}]
  %s4 = sld [smem:[#allocation0]]
  $region30: #{tpu_custom_call.1} parent=0
    _
  %s6 = ssub.s32 1, %s4
  %s7 = scalar_select 0, %s6, %s4
  $region1: #{tpu_custom_call.1} parent=0
    #allocation2 [shape = 'u8[2560]{0}', space=vmem, size = 0xc00, scoped, tag = 'input window, operand 0, single buffered']
    #allocation3 [shape = 's32[1]{0}', space=sflag, size = 0x4, scoped, tag = 'scoped memory for tpu_custom_call.1']
    #allocation4 [shape = 's32[1]{0}', space=sflag, size = 0x4, scoped, tag = 'scoped memory for tpu_custom_call.1']
    #allocation5 [shape = 's32[1]{0}', space=sflag, size = 0x4, scoped, tag = 'scoped memory for tpu_custom_call.1']
    #allocation6 [shape = 'u8[512]{0}', space=smem, size = 0x200, scoped, tag = 'input window, operand 2, single buffered']
    #allocation7 [shape = 'u8[512]{0}', space=vmem, size = 0x400, scoped, tag = 'output window, operand 0, single buffered']
    %8 = vsyncpa [#allocation3], 0
    %9 = vsyncpa [#allocation5], 0
    %10 = vsyncpa [#allocation4], 0
    // Predicated region
    $region2: #{tpu_custom_call.1} parent=1 // pred_check
      _
    $region3: #{tpu_custom_call.1} parent=1 // pred_check_branch
      %12 = sbr.rel (0) target = $region5
    $region4: #{tpu_custom_call.1} parent=1 // pred_region
      %s14 = ssub.s32 80, 80
      %15 = vsyncadd [#allocation3], %s14
      %s16 = sshll.u32 [#allocation2], 4
      %s17 = int_to_ptr.vmem [resolvable:$true] %s16
      %22 = dma.hbm_to_vmem [thread:$0]  %s0, 80, %s17, [#allocation3], 16, 16, 1
    $region5: #{tpu_custom_call.1} parent=1 // pred_fallthru
      _
    // Predicated region
    $region6: #{tpu_custom_call.1} parent=1 // pred_check
      _
    $region7: #{tpu_custom_call.1} parent=1 // pred_check_branch
      %24 = sbr.rel (0) target = $region9
    $region8: #{tpu_custom_call.1} parent=1 // pred_region
      _
    $region9: #{tpu_custom_call.1} parent=1 // pred_fallthru
      _
    // Predicated region
    $region10: #{tpu_custom_call.1} parent=1 // pred_check
      _
    $region11: #{tpu_custom_call.1} parent=1 // pred_check_branch
      %26 = sbr.rel (0) target = $region13
    $region12: #{tpu_custom_call.1} parent=1 // pred_region
      %s28 = ssub.s32 16, 16
      %29 = vsyncadd [#allocation5], %s28
      %s31 = sshll.u32 %s2, 4
      %s32 = int_to_ptr.vmem [resolvable:$true] %s31
      %34 = dma.vmem_to_smem %s32, 16, [#allocation6], [#allocation5]
    $region13: #{tpu_custom_call.1} parent=1 // pred_fallthru
      _
    // Predicated region
    $region14: #{tpu_custom_call.1} parent=1 // pred_check
      _
    $region15: #{tpu_custom_call.1} parent=1 // pred_check_branch
      %36 = sbr.rel (0) target = $region17
    $region16: #{tpu_custom_call.1} parent=1 // pred_region
      %37 = dma.done [#allocation3], 80
    $region17: #{tpu_custom_call.1} parent=1 // pred_fallthru
      _
    // Predicated region
    $region18: #{tpu_custom_call.1} parent=1 // pred_check
      _
    $region19: #{tpu_custom_call.1} parent=1 // pred_check_branch
      %39 = sbr.rel (0) target = $region21
    $region20: #{tpu_custom_call.1} parent=1 // pred_region
      %40 = dma.done [#allocation5], 16
    $region21: #{tpu_custom_call.1} parent=1 // pred_fallthru
      _
    %41 = sfence
    %v42 = vld [vmem:[%s1] sm:$0x1]
    %v43 = vld [vmem:[#allocation2] sm:$0x1]
    %s44 = scalar_lea.vmem [#allocation2], 1
    %v45 = vld [vmem:[%s44] sm:$0x1]
    %v46 = vmax.f32 %v43, %v45
    %s47 = scalar_lea.vmem [#allocation2], 2
    %v48 = vld [vmem:[%s47] sm:$0x1]
    %v49 = vmax.f32 %v46, %v48
    %s50 = scalar_lea.vmem [#allocation2], 3
    %v51 = vld [vmem:[%s50] sm:$0x1]
    %v52 = vmax.f32 %v49, %v51
    %s53 = scalar_lea.vmem [#allocation2], 4
    %v54 = vld [vmem:[%s53] sm:$0x1]
    %v55 = vmax.f32 %v52, %v54
    %v56 = vsub.f32 %v43, %v55
    %v57 = vmul.f32 %v56, 1.442695
    %v58 = vpow.pop %v57
    %vm59 = vcmp.eq.s32.totalorder %v42, 0
    %v60 = vsel %vm59, %v43, 0.0
    %s61 = sld [smem:[#allocation6]]
    %v62 = vstv %s61
    %v63 = vsel %vm59, %v62, 0.0
    %v64 = vsub.f32 %v45, %v55
    %v65 = vmul.f32 %v64, 1.442695
    %v66 = vpow.pop %v65
    %v67 = vadd.f32 %v58, %v66
    %vm68 = vcmp.eq.s32.totalorder %v42, 1
    %v69 = vsel %vm68, %v45, %v60
    %s70 = sld [smem:[#allocation6 + $0x1]]
    %v71 = vstv %s70
    %v72 = vsel %vm68, %v71, %v63
    %v73 = vsub.f32 %v48, %v55
    %v74 = vmul.f32 %v73, 1.442695
    %v75 = vpow.pop %v74
    %v76 = vadd.f32 %v67, %v75
    %vm77 = vcmp.eq.s32.totalorder %v42, 2
    %v78 = vsel %vm77, %v48, %v69
    %s79 = sld [smem:[#allocation6 + $0x2]]
    %v80 = vstv %s79
    %v81 = vsel %vm77, %v80, %v72
    %v82 = vsub.f32 %v51, %v55
    %v83 = vmul.f32 %v82, 1.442695
    %v84 = vpow.pop %v83
    %v85 = vadd.f32 %v76, %v84
    %vm86 = vcmp.eq.s32.totalorder %v42, 3
    %v87 = vsel %vm86, %v51, %v78
    %s88 = sld [smem:[#allocation6 + $0x3]]
    %v89 = vstv %s88
    %v90 = vsel %vm86, %v89, %v81
    %v91 = vsub.f32 %v54, %v55
    %v92 = vmul.f32 %v91, 1.442695
    %v93 = vpow.pop %v92
    %v94 = vadd.f32 %v85, %v93
    %vm95 = vcmp.eq.s32.totalorder %v42, 4
    %v96 = vsel %vm95, %v54, %v87
    %s97 = sld [smem:[#allocation6 + $0x4]]
    %v98 = vstv %s97
    %v99 = vsel %vm95, %v98, %v90
    %v100 = vlog2.pop %v94
    %v101 = vmul.f32 %v100, 0.6931472
    %v102 = vadd.f32 %v55, %v101
    %v103 = vsub.f32 %v102, %v96
    %v104 = vsub.f32 0.0, %v103
    %v105 = vmul.f32 %v104, 1.442695
    %v106 = vpow.pop %v105
    %v107 = vsub.f32 1.0, %v106
    %v108 = vmul.f32 %v107, %v107
    %v109 = vmul.f32 %v99, %v108
    %v110 = vmul.f32 %v109, %v103
    %v111 = vadd.f32 %v110, 0.0
    %112 = vst [vmem:[#allocation7] sm:$0x1] %v111
    // Predicated region
    $region22: #{tpu_custom_call.1} parent=1 // pred_check
      _
    $region23: #{tpu_custom_call.1} parent=1 // pred_check_branch
      %114 = sbr.rel (0) target = $region25
    $region24: #{tpu_custom_call.1} parent=1 // pred_region
      %s116 = ssub.s32 16, 16
      %117 = vsyncadd [#allocation4], %s116
      %s119 = sshll.u32 [#allocation7], 4
      %s120 = int_to_ptr.vmem [resolvable:$true] %s119
      %122 = dma.vmem_to_hbm [thread:$0]  %s120, 16, %s3, [#allocation4]
    $region25: #{tpu_custom_call.1} parent=1 // pred_fallthru
      _
    // Predicated region
    $region26: #{tpu_custom_call.1} parent=1 // pred_check
      _
    $region27: #{tpu_custom_call.1} parent=1 // pred_check_branch
      %124 = sbr.rel (0) target = $region29
    $region28: #{tpu_custom_call.1} parent=1 // pred_region
      %125 = dma.done [#allocation4], 16
    $region29: #{tpu_custom_call.1} parent=1 // pred_fallthru
      _
    %126 = vsyncpa [#allocation3], 1
    %127 = vsyncpa [#allocation4], 1
    %128 = vsyncpa [#allocation5], 1

</llo_original>
